<compile_context>
chip_gen: v5e
topology: v5e:2x2
jax: 0.10.0
libtpu: 0.0.40
codegen_flags: <defaults>
</compile_context>

<pallas_src>
import jax
import jax.numpy as jnp
from jax.experimental import pallas as pl
from jax.experimental.pallas import tpu as pltpu


def _fused_kernel(x84_ref, x77_ref, s1_ref, w_ref, b_ref, o_ref):
    # BN1 (folded scale) + residual add, channel-major: (Cin, TILE_M)
    z = x77_ref[...] + x84_ref[...] * s1_ref[...]
    # 1x1 conv with BN2 folded in: W'(Cout,Cin) @ z(Cin,TILE_M) + b'(Cout,1)
    o_ref[...] = (
        jnp.dot(w_ref[...], z, preferred_element_type=jnp.float32) + b_ref[...]
    )


def fused_bn_add_conv_bn(x84_nchw, x77_nchw, s1_col, w_scaled, b_col, *, tile_m=512):
    """Fused BN + add + 1x1 conv + BN. Params pre-folded. NCHW f32 in/out."""
    N, Cin, H, W = x84_nchw.shape
    Cout = w_scaled.shape[0]
    M = N * H * W

    # NCHW -> channel-major (Cin, M). For N == 1 this is a free reshape
    # (the (1,0,2,3) transpose only moves a size-1 axis).
    x84_cm = jnp.transpose(x84_nchw, (1, 0, 2, 3)).reshape(Cin, M)
    x77_cm = jnp.transpose(x77_nchw, (1, 0, 2, 3)).reshape(Cin, M)

    # Lane-dense tiles: pad M up to a multiple of 128, then to a multiple of
    # the tile size. Padded columns compute to b' and are sliced off.
    m_pad = ((M + 127) // 128) * 128
    tile_m = min(tile_m, m_pad)
    m_pad = ((m_pad + tile_m - 1) // tile_m) * tile_m
    if m_pad != M:
        pad = ((0, 0), (0, m_pad - M))
        x84_cm = jnp.pad(x84_cm, pad)
        x77_cm = jnp.pad(x77_cm, pad)

    grid = (m_pad // tile_m,)
    flops = 2 * M * Cin * Cout
    bytes_accessed = 4 * (2 * M * Cin + Cin * Cout + M * Cout + Cin + Cout)

    out_cm = pl.pallas_call(
        _fused_kernel,
        out_shape=jax.ShapeDtypeStruct((Cout, m_pad), jnp.float32),
        grid_spec=pltpu.PrefetchScalarGridSpec(
            num_scalar_prefetch=0,
            grid=grid,
            in_specs=[
                pl.BlockSpec((Cin, tile_m), lambda i: (0, i)),   # x84 tile
                pl.BlockSpec((Cin, tile_m), lambda i: (0, i)),   # x77 tile
                pl.BlockSpec((Cin, 1), lambda i: (0, 0)),        # s1 (per-in-ch)
                pl.BlockSpec((Cout, Cin), lambda i: (0, 0)),     # W' (BN2-scaled)
                pl.BlockSpec((Cout, 1), lambda i: (0, 0)),       # fused bias b'
            ],
            out_specs=pl.BlockSpec((Cout, tile_m), lambda i: (0, i)),
        ),
        compiler_params=pltpu.CompilerParams(
            dimension_semantics=("parallel",),
        ),
        cost_estimate=pl.CostEstimate(
            flops=flops, transcendentals=0, bytes_accessed=bytes_accessed
        ),
    )(x84_cm, x77_cm, s1_col, w_scaled, b_col)

    # (Cout, M) -> NCHW (free for N == 1)
    out_cm = out_cm[:, :M]
    return jnp.transpose(out_cm.reshape(Cout, N, H, W), (1, 0, 2, 3))


def make_params(key):
    """Deterministic synthetic parameters matching the PyTorch module."""
    ks = jax.random.split(key, 9)
    Cin, Cout = 64, 384

    # BatchNorm2d(64)
    g1 = jax.random.normal(ks[0], (Cin,), jnp.float32) * 0.1 + 1.0
    be1 = jax.random.normal(ks[1], (Cin,), jnp.float32) * 0.1
    rm1 = jax.random.normal(ks[2], (Cin,), jnp.float32) * 0.1
    rv1 = jax.random.uniform(ks[3], (Cin,), jnp.float32, 0.5, 1.5)

    # Conv2d(64, 384, 1x1, bias=False): PyTorch weight (Cout, Cin, 1, 1)
    w = jax.random.normal(ks[4], (Cout, Cin, 1, 1), jnp.float32) * 0.05

    # BatchNorm2d(384)
    g2 = jax.random.normal(ks[5], (Cout,), jnp.float32) * 0.1 + 1.0
    be2 = jax.random.normal(ks[6], (Cout,), jnp.float32) * 0.1
    rm2 = jax.random.normal(ks[7], (Cout,), jnp.float32) * 0.1
    rv2 = jax.random.uniform(ks[8], (Cout,), jnp.float32, 0.5, 1.5)

    return dict(g1=g1, be1=be1, rm1=rm1, rv1=rv1, w=w,
                g2=g2, be2=be2, rm2=rm2, rv2=rv2, eps=1e-5)


def fold_params(raw):
    """Fold both BNs (inference mode) into s1, W', b' (exact algebra)."""
    eps = raw["eps"]
    s1 = raw["g1"] / jnp.sqrt(raw["rv1"] + eps)          # (Cin,)
    b1 = raw["be1"] - raw["rm1"] * s1                    # (Cin,)
    s2 = raw["g2"] / jnp.sqrt(raw["rv2"] + eps)          # (Cout,)
    b2 = raw["be2"] - raw["rm2"] * s2                    # (Cout,)
    w = raw["w"][:, :, 0, 0]                             # (Cout, Cin)
    w_scaled = w * s2[:, None]                           # BN2 scale into weight
    b_fused = b2 + s2 * (w @ b1)                         # BN1+BN2 shifts into bias
    Cin, Cout = w.shape[1], w.shape[0]
    return s1.reshape(Cin, 1), w_scaled, b_fused.reshape(Cout, 1)


def reference(x84, x77, raw):
    """Pure-JAX reference mirroring the unfused PyTorch module (eval mode)."""
    eps = raw["eps"]
    s1 = (raw["g1"] / jnp.sqrt(raw["rv1"] + eps)).reshape(1, -1, 1, 1)
    b1 = (raw["be1"] - raw["rm1"] * raw["g1"] / jnp.sqrt(raw["rv1"] + eps)).reshape(1, -1, 1, 1)
    x85 = x84 * s1 + b1
    x86 = x77 + x85
    w = raw["w"][:, :, 0, 0]                              # (Cout, Cin)
    x87 = jnp.einsum("oc,nchw->nohw", w, x86,
                     precision=jax.lax.Precision.HIGHEST)
    s2 = (raw["g2"] / jnp.sqrt(raw["rv2"] + eps)).reshape(1, -1, 1, 1)
    b2 = (raw["be2"] - raw["rm2"] * raw["g2"] / jnp.sqrt(raw["rv2"] + eps)).reshape(1, -1, 1, 1)
    return x87 * s2 + b2


if __name__ == "__main__":
    key = jax.random.PRNGKey(0)
    k_x84, k_x77, k_p = jax.random.split(key, 3)

    # Shapes implied by the module's forward: NCHW [1, 64, 14, 14]
    x84 = jax.random.normal(k_x84, (1, 64, 14, 14), jnp.float32)
    x77 = jax.random.normal(k_x77, (1, 64, 14, 14), jnp.float32)

    raw = make_params(k_p)
    s1_col, w_scaled, b_col = fold_params(raw)

    out = fused_bn_add_conv_bn(x84, x77, s1_col, w_scaled, b_col)
    out = jax.block_until_ready(out)

    ref = reference(x84, x77, raw)
    assert out.shape == (1, 384, 14, 14)
    assert jnp.allclose(out, ref, atol=1e-3, rtol=1e-3), float(
        jnp.max(jnp.abs(out - ref))
    )

    print("KERNEL_OK")
</pallas_src>

<mosaic_0001>
module attributes {stable_mosaic.version = 11 : i64} {
  func.func @_fused_kernel(%arg0: i32, %arg1: memref<64x256xf32, #tpu.memory_space<vmem>>, %arg2: memref<64x256xf32, #tpu.memory_space<vmem>>, %arg3: memref<64x1xf32, #tpu.memory_space<vmem>>, %arg4: memref<384x64xf32, #tpu.memory_space<vmem>>, %arg5: memref<384x1xf32, #tpu.memory_space<vmem>>, %arg6: memref<384x256xf32, #tpu.memory_space<vmem>>) attributes {dimension_semantics = [#tpu.dimension_semantics<parallel>], iteration_bounds = array<i64: 1>, scalar_prefetch = 0 : i64, scratch_operands = 0 : i64, tpu.core_type = #tpu.core_type<tc>, window_params = [{transform_indices = @transform_0, window_bounds = array<i64: 64, 256>}, {transform_indices = @transform_1, window_bounds = array<i64: 64, 256>}, {pipeline_mode = #tpu.pipeline_mode<synchronous>, transform_indices = @transform_2, window_bounds = array<i64: 64, 1>}, {pipeline_mode = #tpu.pipeline_mode<synchronous>, transform_indices = @transform_3, window_bounds = array<i64: 384, 64>}, {pipeline_mode = #tpu.pipeline_mode<synchronous>, transform_indices = @transform_4, window_bounds = array<i64: 384, 1>}, {transform_indices = @transform_5, window_bounds = array<i64: 384, 256>}]} {
    %c0 = arith.constant 0 : index
    %c0_0 = arith.constant 0 : index
    %0 = vector.load %arg2[%c0, %c0_0] : memref<64x256xf32, #tpu.memory_space<vmem>>, vector<64x256xf32>
    %c0_1 = arith.constant 0 : index
    %c0_2 = arith.constant 0 : index
    %1 = vector.load %arg1[%c0_1, %c0_2] : memref<64x256xf32, #tpu.memory_space<vmem>>, vector<64x256xf32>
    %c0_3 = arith.constant 0 : index
    %c0_4 = arith.constant 0 : index
    %2 = vector.load %arg3[%c0_3, %c0_4] : memref<64x1xf32, #tpu.memory_space<vmem>>, vector<64x1xf32>
    %3 = vector.broadcast %2 : vector<64x1xf32> to vector<64x256xf32>
    %4 = arith.mulf %1, %3 : vector<64x256xf32>
    %5 = arith.addf %0, %4 : vector<64x256xf32>
    %c0_5 = arith.constant 0 : index
    %c0_6 = arith.constant 0 : index
    %6 = vector.load %arg4[%c0_5, %c0_6] : memref<384x64xf32, #tpu.memory_space<vmem>>, vector<384x64xf32>
    %cst = arith.constant dense<0.000000e+00> : vector<384x256xf32>
    %7 = tpu.matmul %6, %5, %cst {dimension_numbers = #tpu.dot_dimension_numbers<[1], [0], [0], [1], [0, 0, 1, 1], [], []>} : vector<384x64xf32>, vector<64x256xf32>, vector<384x256xf32> -> vector<384x256xf32>
    %c0_7 = arith.constant 0 : index
    %c0_8 = arith.constant 0 : index
    %8 = vector.load %arg5[%c0_7, %c0_8] : memref<384x1xf32, #tpu.memory_space<vmem>>, vector<384x1xf32>
    %9 = vector.broadcast %8 : vector<384x1xf32> to vector<384x256xf32>
    %10 = arith.addf %7, %9 : vector<384x256xf32>
    %c0_9 = arith.constant 0 : index
    %c0_10 = arith.constant 0 : index
    %11 = vector.load %arg6[%c0_9, %c0_10] : memref<384x256xf32, #tpu.memory_space<vmem>>, vector<384x256xf32>
    tpu.vector_store %arg6[%c0_9, %c0_10], %10 {strides = array<i32>} : memref<384x256xf32, #tpu.memory_space<vmem>>, vector<384x256xf32>,
    return
  }
  func.func @transform_0(%arg0: i32) -> (i32, i32) {
    %c0_i32 = arith.constant 0 : i32
    %c0_i32_0 = arith.constant 0 : i32
    return %c0_i32, %arg0 : i32, i32
  }
  func.func @transform_1(%arg0: i32) -> (i32, i32) {
    %c0_i32 = arith.constant 0 : i32
    %c0_i32_0 = arith.constant 0 : i32
    return %c0_i32, %arg0 : i32, i32
  }
  func.func @transform_2(%arg0: i32) -> (i32, i32) {
    %c0_i32 = arith.constant 0 : i32
    %c0_i32_0 = arith.constant 0 : i32
    %c0_i32_1 = arith.constant 0 : i32
    return %c0_i32, %c0_i32_0 : i32, i32
  }
  func.func @transform_3(%arg0: i32) -> (i32, i32) {
    %c0_i32 = arith.constant 0 : i32
    %c0_i32_0 = arith.constant 0 : i32
    %c0_i32_1 = arith.constant 0 : i32
    return %c0_i32, %c0_i32_0 : i32, i32
  }
  func.func @transform_4(%arg0: i32) -> (i32, i32) {
    %c0_i32 = arith.constant 0 : i32
    %c0_i32_0 = arith.constant 0 : i32
    %c0_i32_1 = arith.constant 0 : i32
    return %c0_i32, %c0_i32_0 : i32, i32
  }
  func.func @transform_5(%arg0: i32) -> (i32, i32) {
    %c0_i32 = arith.constant 0 : i32
    %c0_i32_0 = arith.constant 0 : i32
    return %c0_i32, %arg0 : i32, i32
  }
}

</mosaic_0001>

<llo_original>
// kernel: tpu_custom_call.1
$region0: #{tpu_custom_call.1}
  #allocation0 [shape = 'u32[]', space=smem, size = 0x4, offset = 0x4, fixed_abs, tag = 'smem constant byte address 0x4 - core index']
  #allocation1 [shape = 'u32[72,128]{1,0:T(1,128)}', space=vmem, size = 0x9000, scoped, tag = 'internal scratch']
  %s0 = inlined_call_operand.vmem [shape: f32[64,256], index: 0, kind: input, shape index: {}]
  %s1 = inlined_call_operand.vmem [shape: f32[64,256], index: 1, kind: input, shape index: {}]
  %s2 = inlined_call_operand.vmem [shape: f32[64,1], index: 2, kind: input, shape index: {}]
  %s3 = inlined_call_operand.vmem [shape: f32[384,64], index: 3, kind: input, shape index: {}]
  %s4 = inlined_call_operand.vmem [shape: f32[384,1], index: 4, kind: input, shape index: {}]
  %s5 = inlined_call_operand.hbm [shape: f32[384,256], index: 5, kind: output, shape index: {}]
  %s6 = sld [smem:[#allocation0]]
  $region30: #{tpu_custom_call.1} parent=0
    _
  %s8 = ssub.s32 1, %s6
  %s9 = scalar_select 0, %s8, %s6
  $region1: #{tpu_custom_call.1} parent=0
    #allocation2 [shape = 'u8[393216]{0}', space=vmem, size = 0x60000, scoped, tag = 'output window, operand 0, single buffered']
    #allocation3 [shape = 's32[1]{0}', space=sflag, size = 0x4, scoped, tag = 'scoped memory for tpu_custom_call.1']
    %10 = vsyncpa [#allocation3], 0
    // Predicated region
    $region2: #{tpu_custom_call.1} parent=1 // pred_check
      _
    $region3: #{tpu_custom_call.1} parent=1 // pred_check_branch
      %12 = sbr.rel (0) target = $region5
    $region4: #{tpu_custom_call.1} parent=1 // pred_region
      _
    $region5: #{tpu_custom_call.1} parent=1 // pred_fallthru
      _
    // Predicated region
    $region6: #{tpu_custom_call.1} parent=1 // pred_check
      _
    $region7: #{tpu_custom_call.1} parent=1 // pred_check_branch
      %14 = sbr.rel (0) target = $region9
    $region8: #{tpu_custom_call.1} parent=1 // pred_region
      _
    $region9: #{tpu_custom_call.1} parent=1 // pred_fallthru
      _
    // Predicated region
    $region10: #{tpu_custom_call.1} parent=1 // pred_check
      _
    $region11: #{tpu_custom_call.1} parent=1 // pred_check_branch
      %16 = sbr.rel (0) target = $region13
    $region12: #{tpu_custom_call.1} parent=1 // pred_region
      _
    $region13: #{tpu_custom_call.1} parent=1 // pred_fallthru
      _
    // Predicated region
    $region14: #{tpu_custom_call.1} parent=1 // pred_check
      _
    $region15: #{tpu_custom_call.1} parent=1 // pred_check_branch
      %18 = sbr.rel (0) target = $region17
    $region16: #{tpu_custom_call.1} parent=1 // pred_region
      _
    $region17: #{tpu_custom_call.1} parent=1 // pred_fallthru
      _
    // Predicated region
    $region18: #{tpu_custom_call.1} parent=1 // pred_check
      _
    $region19: #{tpu_custom_call.1} parent=1 // pred_check_branch
      %20 = sbr.rel (0) target = $region21
    $region20: #{tpu_custom_call.1} parent=1 // pred_region
      _
    $region21: #{tpu_custom_call.1} parent=1 // pred_fallthru
      _
    %v21 = vld [vmem:[%s1] sm:$0xff]
    %v22 = vld [vmem:[%s1 + $0x8] sm:$0xff]
    %v23 = vld [vmem:[%s1 + $0x10] sm:$0xff]
    %v24 = vld [vmem:[%s1 + $0x18] sm:$0xff]
    %v25 = vld [vmem:[%s1 + $0x20] sm:$0xff]
    %v26 = vld [vmem:[%s1 + $0x28] sm:$0xff]
    %v27 = vld [vmem:[%s1 + $0x30] sm:$0xff]
    %v28 = vld [vmem:[%s1 + $0x38] sm:$0xff]
    %v29 = vld [vmem:[%s1 + $0x40] sm:$0xff]
    %v30 = vld [vmem:[%s1 + $0x48] sm:$0xff]
    %v31 = vld [vmem:[%s1 + $0x50] sm:$0xff]
    %v32 = vld [vmem:[%s1 + $0x58] sm:$0xff]
    %v33 = vld [vmem:[%s1 + $0x60] sm:$0xff]
    %v34 = vld [vmem:[%s1 + $0x68] sm:$0xff]
    %v35 = vld [vmem:[%s1 + $0x70] sm:$0xff]
    %v36 = vld [vmem:[%s1 + $0x78] sm:$0xff]
    %v37 = vld [vmem:[%s0] sm:$0xff]
    %v38 = vld [vmem:[%s0 + $0x8] sm:$0xff]
    %v39 = vld [vmem:[%s0 + $0x10] sm:$0xff]
    %v40 = vld [vmem:[%s0 + $0x18] sm:$0xff]
    %v41 = vld [vmem:[%s0 + $0x20] sm:$0xff]
    %v42 = vld [vmem:[%s0 + $0x28] sm:$0xff]
    %v43 = vld [vmem:[%s0 + $0x30] sm:$0xff]
    %v44 = vld [vmem:[%s0 + $0x38] sm:$0xff]
    %v45 = vld [vmem:[%s0 + $0x40] sm:$0xff]
    %v46 = vld [vmem:[%s0 + $0x48] sm:$0xff]
    %v47 = vld [vmem:[%s0 + $0x50] sm:$0xff]
    %v48 = vld [vmem:[%s0 + $0x58] sm:$0xff]
    %v49 = vld [vmem:[%s0 + $0x60] sm:$0xff]
    %v50 = vld [vmem:[%s0 + $0x68] sm:$0xff]
    %v51 = vld [vmem:[%s0 + $0x70] sm:$0xff]
    %v52 = vld [vmem:[%s0 + $0x78] sm:$0xff]
    %v53 = vld [vmem:[%s2] sm:$0xff]
    %v54 = vld [vmem:[%s2 + $0x8] sm:$0xff]
    %v55 = vld [vmem:[%s2 + $0x10] sm:$0xff]
    %v56 = vld [vmem:[%s2 + $0x18] sm:$0xff]
    %v57 = vld [vmem:[%s2 + $0x20] sm:$0xff]
    %v58 = vld [vmem:[%s2 + $0x28] sm:$0xff]
    %v59 = vld [vmem:[%s2 + $0x30] sm:$0xff]
    %v60 = vld [vmem:[%s2 + $0x38] sm:$0xff]
    %62 = vset.pattern.permute.xlu0 0
    %63 = vperm.xlu0 %62, %v53
    %v64 = vpop.permute.xlu0 %63
    %67 = vset.pattern.permute.xlu0 0
    %68 = vperm.xlu0 %67, %v54
    %v69 = vpop.permute.xlu0 %68
    %72 = vset.pattern.permute.xlu0 0
    %73 = vperm.xlu0 %72, %v55
    %v74 = vpop.permute.xlu0 %73
    %77 = vset.pattern.permute.xlu0 0
    %78 = vperm.xlu0 %77, %v56
    %v79 = vpop.permute.xlu0 %78
    %82 = vset.pattern.permute.xlu0 0
    %83 = vperm.xlu0 %82, %v57
    %v84 = vpop.permute.xlu0 %83
    %87 = vset.pattern.permute.xlu0 0
    %88 = vperm.xlu0 %87, %v58
    %v89 = vpop.permute.xlu0 %88
    %92 = vset.pattern.permute.xlu0 0
    %93 = vperm.xlu0 %92, %v59
    %v94 = vpop.permute.xlu0 %93
    %97 = vset.pattern.permute.xlu0 0
    %98 = vperm.xlu0 %97, %v60
    %v99 = vpop.permute.xlu0 %98
    %v101 = vmul.f32 %v37, %v64
    %v102 = vmul.f32 %v38, %v64
    %v103 = vmul.f32 %v39, %v69
    %v104 = vmul.f32 %v40, %v69
    %v105 = vmul.f32 %v41, %v74
    %v106 = vmul.f32 %v42, %v74
    %v107 = vmul.f32 %v43, %v79
    %v108 = vmul.f32 %v44, %v79
    %v109 = vmul.f32 %v45, %v84
    %v110 = vmul.f32 %v46, %v84
    %v111 = vmul.f32 %v47, %v89
    %v112 = vmul.f32 %v48, %v89
    %v113 = vmul.f32 %v49, %v94
    %v114 = vmul.f32 %v50, %v94
    %v115 = vmul.f32 %v51, %v99
    %v116 = vmul.f32 %v52, %v99
    %v117 = vadd.f32 %v21, %v101
    %v118 = vadd.f32 %v22, %v102
    %v119 = vadd.f32 %v23, %v103
    %v120 = vadd.f32 %v24, %v104
    %v121 = vadd.f32 %v25, %v105
    %v122 = vadd.f32 %v26, %v106
    %v123 = vadd.f32 %v27, %v107
    %v124 = vadd.f32 %v28, %v108
    %v125 = vadd.f32 %v29, %v109
    %v126 = vadd.f32 %v30, %v110
    %v127 = vadd.f32 %v31, %v111
    %v128 = vadd.f32 %v32, %v112
    %v129 = vadd.f32 %v33, %v113
    %v130 = vadd.f32 %v34, %v114
    %v131 = vadd.f32 %v35, %v115
    %v132 = vadd.f32 %v36, %v116
    %v133 = vld [vmem:[%s3] sm:$0xff]
    %v134 = vld [vmem:[%s3 + $0x8] sm:$0xff]
    %v135 = vld [vmem:[%s3 + $0x10] sm:$0xff]
    %v136 = vld [vmem:[%s3 + $0x18] sm:$0xff]
    %v137 = vld [vmem:[%s3 + $0x20] sm:$0xff]
    %v138 = vld [vmem:[%s3 + $0x28] sm:$0xff]
    %v139 = vld [vmem:[%s3 + $0x30] sm:$0xff]
    %v140 = vld [vmem:[%s3 + $0x38] sm:$0xff]
    %v141 = vld [vmem:[%s3 + $0x40] sm:$0xff]
    %v142 = vld [vmem:[%s3 + $0x48] sm:$0xff]
    %v143 = vld [vmem:[%s3 + $0x50] sm:$0xff]
    %v144 = vld [vmem:[%s3 + $0x58] sm:$0xff]
    %v145 = vld [vmem:[%s3 + $0x60] sm:$0xff]
    %v146 = vld [vmem:[%s3 + $0x68] sm:$0xff]
    %v147 = vld [vmem:[%s3 + $0x70] sm:$0xff]
    %v148 = vld [vmem:[%s3 + $0x78] sm:$0xff]
    %v149 = vld [vmem:[%s3 + $0x80] sm:$0xff]
    %v150 = vld [vmem:[%s3 + $0x88] sm:$0xff]
    %v151 = vld [vmem:[%s3 + $0x90] sm:$0xff]
    %v152 = vld [vmem:[%s3 + $0x98] sm:$0xff]
    %v153 = vld [vmem:[%s3 + $0xa0] sm:$0xff]
    %v154 = vld [vmem:[%s3 + $0xa8] sm:$0xff]
    %v155 = vld [vmem:[%s3 + $0xb0] sm:$0xff]
    %v156 = vld [vmem:[%s3 + $0xb8] sm:$0xff]
    %v157 = vld [vmem:[%s3 + $0xc0] sm:$0xff]
    %v158 = vld [vmem:[%s3 + $0xc8] sm:$0xff]
    %v159 = vld [vmem:[%s3 + $0xd0] sm:$0xff]
    %v160 = vld [vmem:[%s3 + $0xd8] sm:$0xff]
    %v161 = vld [vmem:[%s3 + $0xe0] sm:$0xff]
    %v162 = vld [vmem:[%s3 + $0xe8] sm:$0xff]
    %v163 = vld [vmem:[%s3 + $0xf0] sm:$0xff]
    %v164 = vld [vmem:[%s3 + $0xf8] sm:$0xff]
    %v165 = vld [vmem:[%s3 + $0x100] sm:$0xff]
    %v166 = vld [vmem:[%s3 + $0x108] sm:$0xff]
    %v167 = vld [vmem:[%s3 + $0x110] sm:$0xff]
    %v168 = vld [vmem:[%s3 + $0x118] sm:$0xff]
    %v169 = vld [vmem:[%s3 + $0x120] sm:$0xff]
    %v170 = vld [vmem:[%s3 + $0x128] sm:$0xff]
    %v171 = vld [vmem:[%s3 + $0x130] sm:$0xff]
    %v172 = vld [vmem:[%s3 + $0x138] sm:$0xff]
    %v173 = vld [vmem:[%s3 + $0x140] sm:$0xff]
    %v174 = vld [vmem:[%s3 + $0x148] sm:$0xff]
    %v175 = vld [vmem:[%s3 + $0x150] sm:$0xff]
    %v176 = vld [vmem:[%s3 + $0x158] sm:$0xff]
    %v177 = vld [vmem:[%s3 + $0x160] sm:$0xff]
    %v178 = vld [vmem:[%s3 + $0x168] sm:$0xff]
    %v179 = vld [vmem:[%s3 + $0x170] sm:$0xff]
    %v180 = vld [vmem:[%s3 + $0x178] sm:$0xff]
    %v181 = vld [vmem:[%s4] sm:$0xff]
    %v182 = vld [vmem:[%s4 + $0x8] sm:$0xff]
    %v183 = vld [vmem:[%s4 + $0x10] sm:$0xff]
    %v184 = vld [vmem:[%s4 + $0x18] sm:$0xff]
    %v185 = vld [vmem:[%s4 + $0x20] sm:$0xff]
    %v186 = vld [vmem:[%s4 + $0x28] sm:$0xff]
    %v187 = vld [vmem:[%s4 + $0x30] sm:$0xff]
    %v188 = vld [vmem:[%s4 + $0x38] sm:$0xff]
    %v189 = vld [vmem:[%s4 + $0x40] sm:$0xff]
    %v190 = vld [vmem:[%s4 + $0x48] sm:$0xff]
    %v191 = vld [vmem:[%s4 + $0x50] sm:$0xff]
    %v192 = vld [vmem:[%s4 + $0x58] sm:$0xff]
    %v193 = vld [vmem:[%s4 + $0x60] sm:$0xff]
    %v194 = vld [vmem:[%s4 + $0x68] sm:$0xff]
    %v195 = vld [vmem:[%s4 + $0x70] sm:$0xff]
    %v196 = vld [vmem:[%s4 + $0x78] sm:$0xff]
    %v197 = vld [vmem:[%s4 + $0x80] sm:$0xff]
    %v198 = vld [vmem:[%s4 + $0x88] sm:$0xff]
    %v199 = vld [vmem:[%s4 + $0x90] sm:$0xff]
    %v200 = vld [vmem:[%s4 + $0x98] sm:$0xff]
    %v201 = vld [vmem:[%s4 + $0xa0] sm:$0xff]
    %v202 = vld [vmem:[%s4 + $0xa8] sm:$0xff]
    %v203 = vld [vmem:[%s4 + $0xb0] sm:$0xff]
    %v204 = vld [vmem:[%s4 + $0xb8] sm:$0xff]
    %v205 = vld [vmem:[%s4 + $0xc0] sm:$0xff]
    %v206 = vld [vmem:[%s4 + $0xc8] sm:$0xff]
    %v207 = vld [vmem:[%s4 + $0xd0] sm:$0xff]
    %v208 = vld [vmem:[%s4 + $0xd8] sm:$0xff]
    %v209 = vld [vmem:[%s4 + $0xe0] sm:$0xff]
    %v210 = vld [vmem:[%s4 + $0xe8] sm:$0xff]
    %v211 = vld [vmem:[%s4 + $0xf0] sm:$0xff]
    %v212 = vld [vmem:[%s4 + $0xf8] sm:$0xff]
    %v213 = vld [vmem:[%s4 + $0x100] sm:$0xff]
    %v214 = vld [vmem:[%s4 + $0x108] sm:$0xff]
    %v215 = vld [vmem:[%s4 + $0x110] sm:$0xff]
    %v216 = vld [vmem:[%s4 + $0x118] sm:$0xff]
    %v217 = vld [vmem:[%s4 + $0x120] sm:$0xff]
    %v218 = vld [vmem:[%s4 + $0x128] sm:$0xff]
    %v219 = vld [vmem:[%s4 + $0x130] sm:$0xff]
    %v220 = vld [vmem:[%s4 + $0x138] sm:$0xff]
    %v221 = vld [vmem:[%s4 + $0x140] sm:$0xff]
    %v222 = vld [vmem:[%s4 + $0x148] sm:$0xff]
    %v223 = vld [vmem:[%s4 + $0x150] sm:$0xff]
    %v224 = vld [vmem:[%s4 + $0x158] sm:$0xff]
    %v225 = vld [vmem:[%s4 + $0x160] sm:$0xff]
    %v226 = vld [vmem:[%s4 + $0x168] sm:$0xff]
    %v227 = vld [vmem:[%s4 + $0x170] sm:$0xff]
    %v228 = vld [vmem:[%s4 + $0x178] sm:$0xff]
    %230 = vset.pattern.permute.xlu0 0
    %231 = vperm.xlu0 %230, %v181
    %v232 = vpop.permute.xlu0 %231
    %235 = vset.pattern.permute.xlu0 0
    %236 = vperm.xlu0 %235, %v182
    %v237 = vpop.permute.xlu0 %236
    %240 = vset.pattern.permute.xlu0 0
    %241 = vperm.xlu0 %240, %v183
    %v242 = vpop.permute.xlu0 %241
    %245 = vset.pattern.permute.xlu0 0
    %246 = vperm.xlu0 %245, %v184
    %v247 = vpop.permute.xlu0 %246
    %250 = vset.pattern.permute.xlu0 0
    %251 = vperm.xlu0 %250, %v185
    %v252 = vpop.permute.xlu0 %251
    %255 = vset.pattern.permute.xlu0 0
    %256 = vperm.xlu0 %255, %v186
    %v257 = vpop.permute.xlu0 %256
    %260 = vset.pattern.permute.xlu0 0
    %261 = vperm.xlu0 %260, %v187
    %v262 = vpop.permute.xlu0 %261
    %265 = vset.pattern.permute.xlu0 0
    %266 = vperm.xlu0 %265, %v188
    %v267 = vpop.permute.xlu0 %266
    %270 = vset.pattern.permute.xlu0 0
    %271 = vperm.xlu0 %270, %v189
    %v272 = vpop.permute.xlu0 %271
    %275 = vset.pattern.permute.xlu0 0
    %276 = vperm.xlu0 %275, %v190
    %v277 = vpop.permute.xlu0 %276
    %280 = vset.pattern.permute.xlu0 0
    %281 = vperm.xlu0 %280, %v191
    %v282 = vpop.permute.xlu0 %281
    %285 = vset.pattern.permute.xlu0 0
    %286 = vperm.xlu0 %285, %v192
    %v287 = vpop.permute.xlu0 %286
    %290 = vset.pattern.permute.xlu0 0
    %291 = vperm.xlu0 %290, %v193
    %v292 = vpop.permute.xlu0 %291
    %295 = vset.pattern.permute.xlu0 0
    %296 = vperm.xlu0 %295, %v194
    %v297 = vpop.permute.xlu0 %296
    %300 = vset.pattern.permute.xlu0 0
    %301 = vperm.xlu0 %300, %v195
    %v302 = vpop.permute.xlu0 %301
    %305 = vset.pattern.permute.xlu0 0
    %306 = vperm.xlu0 %305, %v196
    %v307 = vpop.permute.xlu0 %306
    %310 = vset.pattern.permute.xlu0 0
    %311 = vperm.xlu0 %310, %v197
    %v312 = vpop.permute.xlu0 %311
    %315 = vset.pattern.permute.xlu0 0
    %316 = vperm.xlu0 %315, %v198
    %v317 = vpop.permute.xlu0 %316
    %320 = vset.pattern.permute.xlu0 0
    %321 = vperm.xlu0 %320, %v199
    %v322 = vpop.permute.xlu0 %321
    %325 = vset.pattern.permute.xlu0 0
    %326 = vperm.xlu0 %325, %v200
    %v327 = vpop.permute.xlu0 %326
    %330 = vset.pattern.permute.xlu0 0
    %331 = vperm.xlu0 %330, %v201
    %v332 = vpop.permute.xlu0 %331
    %335 = vset.pattern.permute.xlu0 0
    %336 = vperm.xlu0 %335, %v202
    %v337 = vpop.permute.xlu0 %336
    %340 = vset.pattern.permute.xlu0 0
    %341 = vperm.xlu0 %340, %v203
    %v342 = vpop.permute.xlu0 %341
    %345 = vset.pattern.permute.xlu0 0
    %346 = vperm.xlu0 %345, %v204
    %v347 = vpop.permute.xlu0 %346
    %350 = vset.pattern.permute.xlu0 0
    %351 = vperm.xlu0 %350, %v205
    %v352 = vpop.permute.xlu0 %351
    %355 = vset.pattern.permute.xlu0 0
    %356 = vperm.xlu0 %355, %v206
    %v357 = vpop.permute.xlu0 %356
    %360 = vset.pattern.permute.xlu0 0
    %361 = vperm.xlu0 %360, %v207
    %v362 = vpop.permute.xlu0 %361
    %365 = vset.pattern.permute.xlu0 0
    %366 = vperm.xlu0 %365, %v208
    %v367 = vpop.permute.xlu0 %366
    %370 = vset.pattern.permute.xlu0 0
    %371 = vperm.xlu0 %370, %v209
    %v372 = vpop.permute.xlu0 %371
    %375 = vset.pattern.permute.xlu0 0
    %376 = vperm.xlu0 %375, %v210
    %v377 = vpop.permute.xlu0 %376
    %380 = vset.pattern.permute.xlu0 0
    %381 = vperm.xlu0 %380, %v211
    %v382 = vpop.permute.xlu0 %381
    %385 = vset.pattern.permute.xlu0 0
    %386 = vperm.xlu0 %385, %v212
    %v387 = vpop.permute.xlu0 %386
    %390 = vset.pattern.permute.xlu0 0
    %391 = vperm.xlu0 %390, %v213
    %v392 = vpop.permute.xlu0 %391
    %395 = vset.pattern.permute.xlu0 0
    %396 = vperm.xlu0 %395, %v214
    %v397 = vpop.permute.xlu0 %396
    %400 = vset.pattern.permute.xlu0 0
    %401 = vperm.xlu0 %400, %v215
    %v402 = vpop.permute.xlu0 %401
    %405 = vset.pattern.permute.xlu0 0
    %406 = vperm.xlu0 %405, %v216
    %v407 = vpop.permute.xlu0 %406
    %410 = vset.pattern.permute.xlu0 0
    %411 = vperm.xlu0 %410, %v217
    %v412 = vpop.permute.xlu0 %411
    %415 = vset.pattern.permute.xlu0 0
    %416 = vperm.xlu0 %415, %v218
    %v417 = vpop.permute.xlu0 %416
    %420 = vset.pattern.permute.xlu0 0
    %421 = vperm.xlu0 %420, %v219
    %v422 = vpop.permute.xlu0 %421
    %425 = vset.pattern.permute.xlu0 0
    %426 = vperm.xlu0 %425, %v220
    %v427 = vpop.permute.xlu0 %426
    %430 = vset.pattern.permute.xlu0 0
    %431 = vperm.xlu0 %430, %v221
    %v432 = vpop.permute.xlu0 %431
    %435 = vset.pattern.permute.xlu0 0
    %436 = vperm.xlu0 %435, %v222
    %v437 = vpop.permute.xlu0 %436
    %440 = vset.pattern.permute.xlu0 0
    %441 = vperm.xlu0 %440, %v223
    %v442 = vpop.permute.xlu0 %441
    %445 = vset.pattern.permute.xlu0 0
    %446 = vperm.xlu0 %445, %v224
    %v447 = vpop.permute.xlu0 %446
    %450 = vset.pattern.permute.xlu0 0
    %451 = vperm.xlu0 %450, %v225
    %v452 = vpop.permute.xlu0 %451
    %455 = vset.pattern.permute.xlu0 0
    %456 = vperm.xlu0 %455, %v226
    %v457 = vpop.permute.xlu0 %456
    %460 = vset.pattern.permute.xlu0 0
    %461 = vperm.xlu0 %460, %v227
    %v462 = vpop.permute.xlu0 %461
    %465 = vset.pattern.permute.xlu0 0
    %466 = vperm.xlu0 %465, %v228
    %v467 = vpop.permute.xlu0 %466
    %vm469 = vcmask 523264
    %v471 = vsel %vm469, %v133, 0
    %v474 = vsel %vm469, %v134, 0
    %v477 = vsel %vm469, %v135, 0
    %v480 = vsel %vm469, %v136, 0
    %v483 = vsel %vm469, %v137, 0
    %v486 = vsel %vm469, %v138, 0
    %v489 = vsel %vm469, %v139, 0
    %v492 = vsel %vm469, %v140, 0
    %v495 = vsel %vm469, %v141, 0
    %v498 = vsel %vm469, %v142, 0
    %v501 = vsel %vm469, %v143, 0
    %v504 = vsel %vm469, %v144, 0
    %v507 = vsel %vm469, %v145, 0
    %v510 = vsel %vm469, %v146, 0
    %v513 = vsel %vm469, %v147, 0
    %v516 = vsel %vm469, %v148, 0
    %v519 = vsel %vm469, %v149, 0
    %v522 = vsel %vm469, %v150, 0
    %v525 = vsel %vm469, %v151, 0
    %v528 = vsel %vm469, %v152, 0
    %v531 = vsel %vm469, %v153, 0
    %v534 = vsel %vm469, %v154, 0
    %v537 = vsel %vm469, %v155, 0
    %v540 = vsel %vm469, %v156, 0
    %v543 = vsel %vm469, %v157, 0
    %v546 = vsel %vm469, %v158, 0
    %v549 = vsel %vm469, %v159, 0
    %v552 = vsel %vm469, %v160, 0
    %v555 = vsel %vm469, %v161, 0
    %v558 = vsel %vm469, %v162, 0
    %v561 = vsel %vm469, %v163, 0
    %v564 = vsel %vm469, %v164, 0
    %v567 = vsel %vm469, %v165, 0
    %v570 = vsel %vm469, %v166, 0
    %v573 = vsel %vm469, %v167, 0
    %v576 = vsel %vm469, %v168, 0
    %v579 = vsel %vm469, %v169, 0
    %v582 = vsel %vm469, %v170, 0
    %v585 = vsel %vm469, %v171, 0
    %v588 = vsel %vm469, %v172, 0
    %v591 = vsel %vm469, %v173, 0
    %v594 = vsel %vm469, %v174, 0
    %v597 = vsel %vm469, %v175, 0
    %v600 = vsel %vm469, %v176, 0
    %v603 = vsel %vm469, %v177, 0
    %v606 = vsel %vm469, %v178, 0
    %v609 = vsel %vm469, %v179, 0
    %v612 = vsel %vm469, %v180, 0
    %614 = vmatpush.msra.mxu0 0.0
    %615 = vmatpush.msra.mxu0 0.0
    %616 = vmatpush.msra.mxu0 0.0
    %617 = vmatpush.msra.mxu0 0.0
    %618 = vmatpush.msra.mxu0 0.0
    %619 = vmatpush.msra.mxu0 0.0
    %620 = vmatpush.msra.mxu0 0.0
    %621 = vmatpush.msra.mxu0 0.0
    %622 = vmatpush.msra.mxu0 %v131
    %623 = vmatpush.msra.mxu0 %v129
    %624 = vmatpush.msra.mxu0 %v127
    %625 = vmatpush.msra.mxu0 %v125
    %626 = vmatpush.msra.mxu0 %v123
    %627 = vmatpush.msra.mxu0 %v121
    %628 = vmatpush.msra.mxu0 %v119
    %629 = vmatpush.msra.mxu0 %v117
    %630 = vmatmul.f32.gmra.mxu0 %v471
    %v631 = vpop.f32.mrf.mxu0
    %v632 = vadd.f32 %v232, %v631
    %633 = vmatmul.f32.gmra.mxu0 %v474
    %v634 = vpop.f32.mrf.mxu0
    %v635 = vadd.f32 %v237, %v634
    %636 = vmatmul.f32.gmra.mxu0 %v477
    %v637 = vpop.f32.mrf.mxu0
    %v638 = vadd.f32 %v242, %v637
    %639 = vmatmul.f32.gmra.mxu0 %v480
    %v640 = vpop.f32.mrf.mxu0
    %v641 = vadd.f32 %v247, %v640
    %642 = vmatmul.f32.gmra.mxu0 %v483
    %v643 = vpop.f32.mrf.mxu0
    %v644 = vadd.f32 %v252, %v643
    %645 = vmatmul.f32.gmra.mxu0 %v486
    %v646 = vpop.f32.mrf.mxu0
    %v647 = vadd.f32 %v257, %v646
    %648 = vmatmul.f32.gmra.mxu0 %v489
    %v649 = vpop.f32.mrf.mxu0
    %v650 = vadd.f32 %v262, %v649
    %651 = vmatmul.f32.gmra.mxu0 %v492
    %v652 = vpop.f32.mrf.mxu0
    %v653 = vadd.f32 %v267, %v652
    %654 = vmatmul.f32.gmra.mxu0 %v495
    %v655 = vpop.f32.mrf.mxu0
    %v656 = vadd.f32 %v272, %v655
    %657 = vmatmul.f32.gmra.mxu0 %v498
    %v658 = vpop.f32.mrf.mxu0
    %v659 = vadd.f32 %v277, %v658
    %660 = vmatmul.f32.gmra.mxu0 %v501
    %v661 = vpop.f32.mrf.mxu0
    %v662 = vadd.f32 %v282, %v661
    %663 = vmatmul.f32.gmra.mxu0 %v504
    %v664 = vpop.f32.mrf.mxu0
    %v665 = vadd.f32 %v287, %v664
    %666 = vmatmul.f32.gmra.mxu0 %v507
    %v667 = vpop.f32.mrf.mxu0
    %v668 = vadd.f32 %v292, %v667
    %669 = vmatmul.f32.gmra.mxu0 %v510
    %v670 = vpop.f32.mrf.mxu0
    %v671 = vadd.f32 %v297, %v670
    %672 = vmatmul.f32.gmra.mxu0 %v513
    %v673 = vpop.f32.mrf.mxu0
    %v674 = vadd.f32 %v302, %v673
    %675 = vmatmul.f32.gmra.mxu0 %v516
    %v676 = vpop.f32.mrf.mxu0
    %v677 = vadd.f32 %v307, %v676
    %678 = vmatmul.f32.gmra.mxu0 %v519
    %v679 = vpop.f32.mrf.mxu0
    %v680 = vadd.f32 %v312, %v679
    %681 = vmatmul.f32.gmra.mxu0 %v522
    %v682 = vpop.f32.mrf.mxu0
    %v683 = vadd.f32 %v317, %v682
    %684 = vmatmul.f32.gmra.mxu0 %v525
    %v685 = vpop.f32.mrf.mxu0
    %v686 = vadd.f32 %v322, %v685
    %687 = vmatmul.f32.gmra.mxu0 %v528
    %v688 = vpop.f32.mrf.mxu0
    %v689 = vadd.f32 %v327, %v688
    %690 = vmatmul.f32.gmra.mxu0 %v531
    %v691 = vpop.f32.mrf.mxu0
    %v692 = vadd.f32 %v332, %v691
    %693 = vmatmul.f32.gmra.mxu0 %v534
    %v694 = vpop.f32.mrf.mxu0
    %v695 = vadd.f32 %v337, %v694
    %696 = vmatmul.f32.gmra.mxu0 %v537
    %v697 = vpop.f32.mrf.mxu0
    %v698 = vadd.f32 %v342, %v697
    %699 = vmatmul.f32.gmra.mxu0 %v540
    %v700 = vpop.f32.mrf.mxu0
    %v701 = vadd.f32 %v347, %v700
    %702 = vmatmul.f32.gmra.mxu0 %v543
    %v703 = vpop.f32.mrf.mxu0
    %v704 = vadd.f32 %v352, %v703
    %705 = vmatmul.f32.gmra.mxu0 %v546
    %v706 = vpop.f32.mrf.mxu0
    %v707 = vadd.f32 %v357, %v706
    %708 = vmatmul.f32.gmra.mxu0 %v549
    %v709 = vpop.f32.mrf.mxu0
    %v710 = vadd.f32 %v362, %v709
    %711 = vmatmul.f32.gmra.mxu0 %v552
    %v712 = vpop.f32.mrf.mxu0
    %v713 = vadd.f32 %v367, %v712
    %714 = vmatmul.f32.gmra.mxu0 %v555
    %v715 = vpop.f32.mrf.mxu0
    %v716 = vadd.f32 %v372, %v715
    %717 = vmatmul.f32.gmra.mxu0 %v558
    %v718 = vpop.f32.mrf.mxu0
    %v719 = vadd.f32 %v377, %v718
    %720 = vmatmul.f32.gmra.mxu0 %v561
    %v721 = vpop.f32.mrf.mxu0
    %v722 = vadd.f32 %v382, %v721
    %723 = vmatmul.f32.gmra.mxu0 %v564
    %v724 = vpop.f32.mrf.mxu0
    %v725 = vadd.f32 %v387, %v724
    %726 = vmatmul.f32.gmra.mxu0 %v567
    %v727 = vpop.f32.mrf.mxu0
    %v728 = vadd.f32 %v392, %v727
    %729 = vmatmul.f32.gmra.mxu0 %v570
    %v730 = vpop.f32.mrf.mxu0
    %v731 = vadd.f32 %v397, %v730
    %732 = vmatmul.f32.gmra.mxu0 %v573
    %v733 = vpop.f32.mrf.mxu0
    %v734 = vadd.f32 %v402, %v733
    %735 = vmatmul.f32.gmra.mxu0 %v576
    %v736 = vpop.f32.mrf.mxu0
    %v737 = vadd.f32 %v407, %v736
    %738 = vmatmul.f32.gmra.mxu0 %v579
    %v739 = vpop.f32.mrf.mxu0
    %v740 = vadd.f32 %v412, %v739
    %741 = vmatmul.f32.gmra.mxu0 %v582
    %v742 = vpop.f32.mrf.mxu0
    %v743 = vadd.f32 %v417, %v742
    %744 = vmatmul.f32.gmra.mxu0 %v585
    %v745 = vpop.f32.mrf.mxu0
    %v746 = vadd.f32 %v422, %v745
    %747 = vmatmul.f32.gmra.mxu0 %v588
    %v748 = vpop.f32.mrf.mxu0
    %v749 = vadd.f32 %v427, %v748
    %750 = vmatmul.f32.gmra.mxu0 %v591
    %v751 = vpop.f32.mrf.mxu0
    %v752 = vadd.f32 %v432, %v751
    %753 = vmatmul.f32.gmra.mxu0 %v594
    %v754 = vpop.f32.mrf.mxu0
    %v755 = vadd.f32 %v437, %v754
    %756 = vmatmul.f32.gmra.mxu0 %v597
    %v757 = vpop.f32.mrf.mxu0
    %v758 = vadd.f32 %v442, %v757
    %759 = vmatmul.f32.gmra.mxu0 %v600
    %v760 = vpop.f32.mrf.mxu0
    %v761 = vadd.f32 %v447, %v760
    %762 = vmatmul.f32.gmra.mxu0 %v603
    %v763 = vpop.f32.mrf.mxu0
    %v764 = vadd.f32 %v452, %v763
    %765 = vmatmul.f32.gmra.mxu0 %v606
    %v766 = vpop.f32.mrf.mxu0
    %v767 = vadd.f32 %v457, %v766
    %768 = vmatmul.f32.gmra.mxu0 %v609
    %v769 = vpop.f32.mrf.mxu0
    %v770 = vadd.f32 %v462, %v769
    %771 = vmatmul.f32.gmra.mxu0 %v612
    %v772 = vpop.f32.mrf.mxu0
    %v773 = vadd.f32 %v467, %v772
    %774 = vdwg.mxu0
    %775 = vmatpush.msra.mxu0 0.0
    %776 = vmatpush.msra.mxu0 0.0
    %777 = vmatpush.msra.mxu0 0.0
    %778 = vmatpush.msra.mxu0 0.0
    %779 = vmatpush.msra.mxu0 0.0
    %780 = vmatpush.msra.mxu0 0.0
    %781 = vmatpush.msra.mxu0 0.0
    %782 = vmatpush.msra.mxu0 0.0
    %783 = vmatpush.msra.mxu0 %v132
    %784 = vmatpush.msra.mxu0 %v130
    %785 = vmatpush.msra.mxu0 %v128
    %786 = vmatpush.msra.mxu0 %v126
    %787 = vmatpush.msra.mxu0 %v124
    %788 = vmatpush.msra.mxu0 %v122
    %789 = vmatpush.msra.mxu0 %v120
    %790 = vmatpush.msra.mxu0 %v118
    %791 = vmatmul.f32.gmra.mxu0 %v471
    %v792 = vpop.f32.mrf.mxu0
    %v793 = vadd.f32 %v232, %v792
    %794 = vmatmul.f32.gmra.mxu0 %v474
    %v795 = vpop.f32.mrf.mxu0
    %v796 = vadd.f32 %v237, %v795
    %797 = vmatmul.f32.gmra.mxu0 %v477
    %v798 = vpop.f32.mrf.mxu0
    %v799 = vadd.f32 %v242, %v798
    %800 = vmatmul.f32.gmra.mxu0 %v480
    %v801 = vpop.f32.mrf.mxu0
    %v802 = vadd.f32 %v247, %v801
    %803 = vmatmul.f32.gmra.mxu0 %v483
    %v804 = vpop.f32.mrf.mxu0
    %v805 = vadd.f32 %v252, %v804
    %806 = vmatmul.f32.gmra.mxu0 %v486
    %v807 = vpop.f32.mrf.mxu0
    %v808 = vadd.f32 %v257, %v807
    %809 = vmatmul.f32.gmra.mxu0 %v489
    %v810 = vpop.f32.mrf.mxu0
    %v811 = vadd.f32 %v262, %v810
    %812 = vmatmul.f32.gmra.mxu0 %v492
    %v813 = vpop.f32.mrf.mxu0
    %v814 = vadd.f32 %v267, %v813
    %815 = vmatmul.f32.gmra.mxu0 %v495
    %v816 = vpop.f32.mrf.mxu0
    %v817 = vadd.f32 %v272, %v816
    %818 = vmatmul.f32.gmra.mxu0 %v498
    %v819 = vpop.f32.mrf.mxu0
    %v820 = vadd.f32 %v277, %v819
    %821 = vmatmul.f32.gmra.mxu0 %v501
    %v822 = vpop.f32.mrf.mxu0
    %v823 = vadd.f32 %v282, %v822
    %824 = vmatmul.f32.gmra.mxu0 %v504
    %v825 = vpop.f32.mrf.mxu0
    %v826 = vadd.f32 %v287, %v825
    %827 = vmatmul.f32.gmra.mxu0 %v507
    %v828 = vpop.f32.mrf.mxu0
    %v829 = vadd.f32 %v292, %v828
    %830 = vmatmul.f32.gmra.mxu0 %v510
    %v831 = vpop.f32.mrf.mxu0
    %v832 = vadd.f32 %v297, %v831
    %833 = vmatmul.f32.gmra.mxu0 %v513
    %v834 = vpop.f32.mrf.mxu0
    %v835 = vadd.f32 %v302, %v834
    %836 = vmatmul.f32.gmra.mxu0 %v516
    %v837 = vpop.f32.mrf.mxu0
    %v838 = vadd.f32 %v307, %v837
    %839 = vmatmul.f32.gmra.mxu0 %v519
    %v840 = vpop.f32.mrf.mxu0
    %v841 = vadd.f32 %v312, %v840
    %842 = vmatmul.f32.gmra.mxu0 %v522
    %v843 = vpop.f32.mrf.mxu0
    %v844 = vadd.f32 %v317, %v843
    %845 = vmatmul.f32.gmra.mxu0 %v525
    %v846 = vpop.f32.mrf.mxu0
    %v847 = vadd.f32 %v322, %v846
    %848 = vmatmul.f32.gmra.mxu0 %v528
    %v849 = vpop.f32.mrf.mxu0
    %v850 = vadd.f32 %v327, %v849
    %851 = vmatmul.f32.gmra.mxu0 %v531
    %v852 = vpop.f32.mrf.mxu0
    %v853 = vadd.f32 %v332, %v852
    %854 = vmatmul.f32.gmra.mxu0 %v534
    %v855 = vpop.f32.mrf.mxu0
    %v856 = vadd.f32 %v337, %v855
    %857 = vmatmul.f32.gmra.mxu0 %v537
    %v858 = vpop.f32.mrf.mxu0
    %v859 = vadd.f32 %v342, %v858
    %860 = vmatmul.f32.gmra.mxu0 %v540
    %v861 = vpop.f32.mrf.mxu0
    %v862 = vadd.f32 %v347, %v861
    %863 = vmatmul.f32.gmra.mxu0 %v543
    %v864 = vpop.f32.mrf.mxu0
    %v865 = vadd.f32 %v352, %v864
    %866 = vmatmul.f32.gmra.mxu0 %v546
    %v867 = vpop.f32.mrf.mxu0
    %v868 = vadd.f32 %v357, %v867
    %869 = vmatmul.f32.gmra.mxu0 %v549
    %v870 = vpop.f32.mrf.mxu0
    %v871 = vadd.f32 %v362, %v870
    %872 = vmatmul.f32.gmra.mxu0 %v552
    %v873 = vpop.f32.mrf.mxu0
    %v874 = vadd.f32 %v367, %v873
    %875 = vmatmul.f32.gmra.mxu0 %v555
    %v876 = vpop.f32.mrf.mxu0
    %v877 = vadd.f32 %v372, %v876
    %878 = vmatmul.f32.gmra.mxu0 %v558
    %v879 = vpop.f32.mrf.mxu0
    %v880 = vadd.f32 %v377, %v879
    %881 = vmatmul.f32.gmra.mxu0 %v561
    %v882 = vpop.f32.mrf.mxu0
    %v883 = vadd.f32 %v382, %v882
    %884 = vmatmul.f32.gmra.mxu0 %v564
    %v885 = vpop.f32.mrf.mxu0
    %v886 = vadd.f32 %v387, %v885
    %887 = vmatmul.f32.gmra.mxu0 %v567
    %v888 = vpop.f32.mrf.mxu0
    %v889 = vadd.f32 %v392, %v888
    %890 = vmatmul.f32.gmra.mxu0 %v570
    %v891 = vpop.f32.mrf.mxu0
    %v892 = vadd.f32 %v397, %v891
    %893 = vmatmul.f32.gmra.mxu0 %v573
    %v894 = vpop.f32.mrf.mxu0
    %v895 = vadd.f32 %v402, %v894
    %896 = vmatmul.f32.gmra.mxu0 %v576
    %v897 = vpop.f32.mrf.mxu0
    %v898 = vadd.f32 %v407, %v897
    %899 = vmatmul.f32.gmra.mxu0 %v579
    %v900 = vpop.f32.mrf.mxu0
    %v901 = vadd.f32 %v412, %v900
    %902 = vmatmul.f32.gmra.mxu0 %v582
    %v903 = vpop.f32.mrf.mxu0
    %v904 = vadd.f32 %v417, %v903
    %905 = vmatmul.f32.gmra.mxu0 %v585
    %v906 = vpop.f32.mrf.mxu0
    %v907 = vadd.f32 %v422, %v906
    %908 = vmatmul.f32.gmra.mxu0 %v588
    %v909 = vpop.f32.mrf.mxu0
    %v910 = vadd.f32 %v427, %v909
    %911 = vmatmul.f32.gmra.mxu0 %v591
    %v912 = vpop.f32.mrf.mxu0
    %v913 = vadd.f32 %v432, %v912
    %914 = vmatmul.f32.gmra.mxu0 %v594
    %v915 = vpop.f32.mrf.mxu0
    %v916 = vadd.f32 %v437, %v915
    %917 = vmatmul.f32.gmra.mxu0 %v597
    %v918 = vpop.f32.mrf.mxu0
    %v919 = vadd.f32 %v442, %v918
    %920 = vmatmul.f32.gmra.mxu0 %v600
    %v921 = vpop.f32.mrf.mxu0
    %v922 = vadd.f32 %v447, %v921
    %923 = vmatmul.f32.gmra.mxu0 %v603
    %v924 = vpop.f32.mrf.mxu0
    %v925 = vadd.f32 %v452, %v924
    %926 = vmatmul.f32.gmra.mxu0 %v606
    %v927 = vpop.f32.mrf.mxu0
    %v928 = vadd.f32 %v457, %v927
    %929 = vmatmul.f32.gmra.mxu0 %v609
    %v930 = vpop.f32.mrf.mxu0
    %v931 = vadd.f32 %v462, %v930
    %932 = vmatmul.f32.gmra.mxu0 %v612
    %v933 = vpop.f32.mrf.mxu0
    %v934 = vadd.f32 %v467, %v933
    %935 = vdwg.mxu0
    %936 = vst [vmem:[#allocation2] sm:$0xff] %v632
    %937 = vst [vmem:[#allocation2 + $0x8] sm:$0xff] %v793
    %938 = vst [vmem:[#allocation2 + $0x10] sm:$0xff] %v635
    %939 = vst [vmem:[#allocation2 + $0x18] sm:$0xff] %v796
    %940 = vst [vmem:[#allocation2 + $0x20] sm:$0xff] %v638
    %941 = vst [vmem:[#allocation2 + $0x28] sm:$0xff] %v799
    %942 = vst [vmem:[#allocation2 + $0x30] sm:$0xff] %v641
    %943 = vst [vmem:[#allocation2 + $0x38] sm:$0xff] %v802
    %944 = vst [vmem:[#allocation2 + $0x40] sm:$0xff] %v644
    %945 = vst [vmem:[#allocation2 + $0x48] sm:$0xff] %v805
    %946 = vst [vmem:[#allocation2 + $0x50] sm:$0xff] %v647
    %947 = vst [vmem:[#allocation2 + $0x58] sm:$0xff] %v808
    %948 = vst [vmem:[#allocation2 + $0x60] sm:$0xff] %v650
    %949 = vst [vmem:[#allocation2 + $0x68] sm:$0xff] %v811
    %950 = vst [vmem:[#allocation2 + $0x70] sm:$0xff] %v653
    %951 = vst [vmem:[#allocation2 + $0x78] sm:$0xff] %v814
    %952 = vst [vmem:[#allocation2 + $0x80] sm:$0xff] %v656
    %953 = vst [vmem:[#allocation2 + $0x88] sm:$0xff] %v817
    %954 = vst [vmem:[#allocation2 + $0x90] sm:$0xff] %v659
    %955 = vst [vmem:[#allocation2 + $0x98] sm:$0xff] %v820
    %956 = vst [vmem:[#allocation2 + $0xa0] sm:$0xff] %v662
    %957 = vst [vmem:[#allocation2 + $0xa8] sm:$0xff] %v823
    %958 = vst [vmem:[#allocation2 + $0xb0] sm:$0xff] %v665
    %959 = vst [vmem:[#allocation2 + $0xb8] sm:$0xff] %v826
    %960 = vst [vmem:[#allocation2 + $0xc0] sm:$0xff] %v668
    %961 = vst [vmem:[#allocation2 + $0xc8] sm:$0xff] %v829
    %962 = vst [vmem:[#allocation2 + $0xd0] sm:$0xff] %v671
    %963 = vst [vmem:[#allocation2 + $0xd8] sm:$0xff] %v832
    %964 = vst [vmem:[#allocation2 + $0xe0] sm:$0xff] %v674
    %965 = vst [vmem:[#allocation2 + $0xe8] sm:$0xff] %v835
    %966 = vst [vmem:[#allocation2 + $0xf0] sm:$0xff] %v677
    %967 = vst [vmem:[#allocation2 + $0xf8] sm:$0xff] %v838
    %968 = vst [vmem:[#allocation2 + $0x100] sm:$0xff] %v680
    %969 = vst [vmem:[#allocation2 + $0x108] sm:$0xff] %v841
    %970 = vst [vmem:[#allocation2 + $0x110] sm:$0xff] %v683
    %971 = vst [vmem:[#allocation2 + $0x118] sm:$0xff] %v844
    %972 = vst [vmem:[#allocation2 + $0x120] sm:$0xff] %v686
    %973 = vst [vmem:[#allocation2 + $0x128] sm:$0xff] %v847
    %974 = vst [vmem:[#allocation2 + $0x130] sm:$0xff] %v689
    %975 = vst [vmem:[#allocation2 + $0x138] sm:$0xff] %v850
    %976 = vst [vmem:[#allocation2 + $0x140] sm:$0xff] %v692
    %977 = vst [vmem:[#allocation2 + $0x148] sm:$0xff] %v853
    %978 = vst [vmem:[#allocation2 + $0x150] sm:$0xff] %v695
    %979 = vst [vmem:[#allocation2 + $0x158] sm:$0xff] %v856
    %980 = vst [vmem:[#allocation2 + $0x160] sm:$0xff] %v698
    %981 = vst [vmem:[#allocation2 + $0x168] sm:$0xff] %v859
    %982 = vst [vmem:[#allocation2 + $0x170] sm:$0xff] %v701
    %983 = vst [vmem:[#allocation2 + $0x178] sm:$0xff] %v862
    %984 = vst [vmem:[#allocation2 + $0x180] sm:$0xff] %v704
    %985 = vst [vmem:[#allocation2 + $0x188] sm:$0xff] %v865
    %986 = vst [vmem:[#allocation2 + $0x190] sm:$0xff] %v707
    %987 = vst [vmem:[#allocation2 + $0x198] sm:$0xff] %v868
    %988 = vst [vmem:[#allocation2 + $0x1a0] sm:$0xff] %v710
    %989 = vst [vmem:[#allocation2 + $0x1a8] sm:$0xff] %v871
    %990 = vst [vmem:[#allocation2 + $0x1b0] sm:$0xff] %v713
    %991 = vst [vmem:[#allocation2 + $0x1b8] sm:$0xff] %v874
    %992 = vst [vmem:[#allocation2 + $0x1c0] sm:$0xff] %v716
    %993 = vst [vmem:[#allocation2 + $0x1c8] sm:$0xff] %v877
    %994 = vst [vmem:[#allocation2 + $0x1d0] sm:$0xff] %v719
    %995 = vst [vmem:[#allocation2 + $0x1d8] sm:$0xff] %v880
    %996 = vst [vmem:[#allocation2 + $0x1e0] sm:$0xff] %v722
    %997 = vst [vmem:[#allocation2 + $0x1e8] sm:$0xff] %v883
    %998 = vst [vmem:[#allocation2 + $0x1f0] sm:$0xff] %v725
    %999 = vst [vmem:[#allocation2 + $0x1f8] sm:$0xff] %v886
    %1000 = vst [vmem:[#allocation2 + $0x200] sm:$0xff] %v728
    %1001 = vst [vmem:[#allocation2 + $0x208] sm:$0xff] %v889
    %1002 = vst [vmem:[#allocation2 + $0x210] sm:$0xff] %v731
    %1003 = vst [vmem:[#allocation2 + $0x218] sm:$0xff] %v892
    %1004 = vst [vmem:[#allocation2 + $0x220] sm:$0xff] %v734
    %1005 = vst [vmem:[#allocation2 + $0x228] sm:$0xff] %v895
    %1006 = vst [vmem:[#allocation2 + $0x230] sm:$0xff] %v737
    %1007 = vst [vmem:[#allocation2 + $0x238] sm:$0xff] %v898
    %1008 = vst [vmem:[#allocation2 + $0x240] sm:$0xff] %v740
    %1009 = vst [vmem:[#allocation2 + $0x248] sm:$0xff] %v901
    %1010 = vst [vmem:[#allocation2 + $0x250] sm:$0xff] %v743
    %1011 = vst [vmem:[#allocation2 + $0x258] sm:$0xff] %v904
    %1012 = vst [vmem:[#allocation2 + $0x260] sm:$0xff] %v746
    %1013 = vst [vmem:[#allocation2 + $0x268] sm:$0xff] %v907
    %1014 = vst [vmem:[#allocation2 + $0x270] sm:$0xff] %v749
    %1015 = vst [vmem:[#allocation2 + $0x278] sm:$0xff] %v910
    %1016 = vst [vmem:[#allocation2 + $0x280] sm:$0xff] %v752
    %1017 = vst [vmem:[#allocation2 + $0x288] sm:$0xff] %v913
    %1018 = vst [vmem:[#allocation2 + $0x290] sm:$0xff] %v755
    %1019 = vst [vmem:[#allocation2 + $0x298] sm:$0xff] %v916
    %1020 = vst [vmem:[#allocation2 + $0x2a0] sm:$0xff] %v758
    %1021 = vst [vmem:[#allocation2 + $0x2a8] sm:$0xff] %v919
    %1022 = vst [vmem:[#allocation2 + $0x2b0] sm:$0xff] %v761
    %1023 = vst [vmem:[#allocation2 + $0x2b8] sm:$0xff] %v922
    %1024 = vst [vmem:[#allocation2 + $0x2c0] sm:$0xff] %v764
    %1025 = vst [vmem:[#allocation2 + $0x2c8] sm:$0xff] %v925
    %1026 = vst [vmem:[#allocation2 + $0x2d0] sm:$0xff] %v767
    %1027 = vst [vmem:[#allocation2 + $0x2d8] sm:$0xff] %v928
    %1028 = vst [vmem:[#allocation2 + $0x2e0] sm:$0xff] %v770
    %1029 = vst [vmem:[#allocation2 + $0x2e8] sm:$0xff] %v931
    %1030 = vst [vmem:[#allocation2 + $0x2f0] sm:$0xff] %v773
    %1031 = vst [vmem:[#allocation2 + $0x2f8] sm:$0xff] %v934
    // Predicated region
    $region22: #{tpu_custom_call.1} parent=1 // pred_check
      _
    $region23: #{tpu_custom_call.1} parent=1 // pred_check_branch
      %1033 = sbr.rel (0) target = $region25
    $region24: #{tpu_custom_call.1} parent=1 // pred_region
      %1035 = vsyncadd [#allocation3], 0
      %s1036 = sshll.u32 [#allocation2], 4
      %s1037 = int_to_ptr.vmem [resolvable:$true] %s1036
      %s1038 = sshll.u32 %s5, 4
      %s1039 = int_to_ptr.hbm [resolvable:$true] %s1038
      %1044 = dma.vmem_to_hbm [thread:$0]  %s1037, 12288, %s1039, [#allocation3], 256, 256, 16
    $region25: #{tpu_custom_call.1} parent=1 // pred_fallthru
      _
    // Predicated region
    $region26: #{tpu_custom_call.1} parent=1 // pred_check
      _
    $region27: #{tpu_custom_call.1} parent=1 // pred_check_branch
      %1046 = sbr.rel (0) target = $region29
    $region28: #{tpu_custom_call.1} parent=1 // pred_region
      %1048 = dma.done [#allocation3], 12288
    $region29: #{tpu_custom_call.1} parent=1 // pred_fallthru
      _
    %1049 = vsyncpa [#allocation3], 1

</llo_original>
